<compile_context>
chip_gen: v7x
topology: tpu7x:2x2x1
jax: 0.10.0
libtpu: 0.0.40
codegen_flags: <defaults>
</compile_context>

<pallas_src>
import functools
import math

import jax
import jax.numpy as jnp
from jax.experimental import pallas as pl
from jax.experimental.pallas import tpu as pltpu


_GELU_C = (2.0 / math.pi) ** 0.5


def _tanh_gelu(y):
    # 0.5 * y * (1 + tanh(sqrt(2/pi) * (y + 0.044715 * y^3)))  -- exact
    # tanh-approx GELU from the PyTorch reference. tanh runs on the EUP slot.
    return 0.5 * y * (1.0 + jnp.tanh(_GELU_C * (y + 0.044715 * (y * y * y))))


def _round_up(a, m):
    return ((a + m - 1) // m) * m


def _sublane(dtype):
    # sub-32-bit dtypes pack 2/4 rows per sublane.
    return {4: 8, 2: 16, 1: 32}.get(jnp.dtype(dtype).itemsize, 8)


def _device_kind():
    try:
        return jax.devices()[0].device_kind.lower()
    except Exception:  # e.g. no devices during tracing-only use
        return ""


def _vmem_budget(kind):
    if "v7" in kind:
        return 36 << 20   # 64 MiB/TC physical on v7x -> leave headroom
    if "v5" in kind or "v6" in kind:
        return 80 << 20   # 128 MiB physical
    return 32 << 20


# ---------------------------------------------------------------------------
# Kernels
# ---------------------------------------------------------------------------
def _linear_kernel_single_k(x_ref, w_ref, b_ref, o_ref, *, use_activation,
                            precision):
    # Whole K fits in one tile: no accumulator scratch, no zero-init.
    y = jnp.dot(x_ref[...], w_ref[...],
                preferred_element_type=jnp.float32, precision=precision)
    y = y + b_ref[...].astype(jnp.float32)      # b_ref is (1, tn), broadcasts
    if use_activation:
        y = _tanh_gelu(y)
    o_ref[...] = y.astype(o_ref.dtype)


def _linear_kernel_kloop(x_ref, w_ref, b_ref, o_ref, acc_ref, *,
                         use_activation, precision):
    k = pl.program_id(2)
    part = jnp.dot(x_ref[...], w_ref[...],
                   preferred_element_type=jnp.float32, precision=precision)

    # No zero-init write: assign on the first K step, accumulate afterwards.
    @pl.when(k == 0)
    def _():
        acc_ref[...] = part

    @pl.when(k > 0)
    def _():
        acc_ref[...] += part

    # Epilogue only on the final reduction step: bias + (optional) GELU.
    @pl.when(k == pl.num_programs(2) - 1)
    def _():
        y = acc_ref[...] + b_ref[...].astype(jnp.float32)
        if use_activation:
            y = _tanh_gelu(y)
        o_ref[...] = y.astype(o_ref.dtype)


# ---------------------------------------------------------------------------
# Wrapper
# ---------------------------------------------------------------------------
def make_linear_block(w, b, *, use_activation=True, compute_dtype=None,
                      tm=512, tn=1024, tk=None):
    """Build a LinearBlock forward: y = gelu(x @ w + b) (gelu optional).

    w: (in_dim, out_dim) == PyTorch nn.Linear weight.T ; b: (out_dim,).
    Weight/bias padding and dtype casting happen ONCE here (init time), not
    on every forward call. Returns apply(x: (B, in_dim)) -> (B, out_dim).
    """
    K, N = w.shape
    assert b.shape == (N,)
    comp_dt = jnp.dtype(compute_dtype) if compute_dtype is not None else jnp.dtype(w.dtype)
    kind = _device_kind()
    budget = _vmem_budget(kind)

    if tk is None:
        tk = 2048 if comp_dt.itemsize <= 2 else 1024

    # Lane/sublane alignment; clamp tiles to the (padded) problem size.
    Kp = _round_up(K, 128)          # K = lane dim of x and sublane dim of w
    Np = _round_up(N, 128)
    tn = min(tn, Np)
    tk = min(tk, Kp)
    Kp = _round_up(Kp, tk)
    Np = _round_up(Np, tn)

    # One-time padding + cast of the parameters (hoisted off the hot path).
    w_p = w.astype(comp_dt)
    if (Kp, Np) != (K, N):
        w_p = jnp.pad(w_p, ((0, Kp - K), (0, Np - N)))
    b_p = b if Np == N else jnp.pad(b, (0, Np - N))
    b_p = b_p.reshape(1, Np).astype(jnp.float32)

    k_grid = Kp // tk
    # f32 operands: force the accurate multi-pass MXU path so results match an
    # f32 reference; bf16 operands use the native single-pass path.
    precision = (jax.lax.Precision.HIGHEST if comp_dt == jnp.dtype(jnp.float32)
                 else jax.lax.Precision.DEFAULT)
    sub = _sublane(comp_dt)

    def apply(x):
        B, Kx = x.shape
        assert Kx == K
        out_dtype = x.dtype

        Bp = _round_up(B, sub)
        tm_c = min(tm, Bp)
        Bp = _round_up(Bp, tm_c)
        # v7x: guarantee >=2 parallel blocks so both TensorCores get work.
        if ("v7" in kind and (Np // tn) == 1 and (Bp // tm_c) == 1
                and Bp % (2 * sub) == 0):
            tm_c = Bp // 2

        x_p = x.astype(comp_dt)
        if (Bp, Kp) != (B, K):
            x_p = jnp.pad(x_p, ((0, Bp - B), (0, Kp - K)))

        # VMEM budget: double-buffered x/w/b/out tiles (+ f32 accumulator when
        # K is tiled), with headroom, capped per generation.
        ci = comp_dt.itemsize
        oi = jnp.dtype(out_dtype).itemsize
        live = 2 * (tm_c * tk * ci + tk * tn * ci + tn * 4 + tm_c * tn * oi)
        if k_grid > 1:
            live += tm_c * tn * 4
        vmem_limit = int(max(min(budget, live + live // 2 + (4 << 20)), 16 << 20))

        if k_grid == 1:
            kernel = functools.partial(_linear_kernel_single_k,
                                       use_activation=use_activation,
                                       precision=precision)
            grid = (Bp // tm_c, Np // tn)
            in_specs = [
                pl.BlockSpec((tm_c, tk), lambda i, j: (i, 0)),
                pl.BlockSpec((tk, tn), lambda i, j: (0, j)),
                pl.BlockSpec((1, tn), lambda i, j: (0, j)),
            ]
            out_specs = pl.BlockSpec((tm_c, tn), lambda i, j: (i, j))
            scratch = []
            dims = ("parallel", "parallel")
        else:
            kernel = functools.partial(_linear_kernel_kloop,
                                       use_activation=use_activation,
                                       precision=precision)
            grid = (Bp // tm_c, Np // tn, k_grid)
            in_specs = [
                # x block depends on (i, k)
                pl.BlockSpec((tm_c, tk), lambda i, j, k: (i, k)),
                # W block depends on (j, k): re-streamed once per batch tile
                # (k innermost), so total W HBM traffic = W_bytes * Bp/tm.
                pl.BlockSpec((tk, tn), lambda i, j, k: (k, j)),
                pl.BlockSpec((1, tn), lambda i, j, k: (0, j)),
            ]
            # Output block constant across k => accumulator-resident tile.
            out_specs = pl.BlockSpec((tm_c, tn), lambda i, j, k: (i, j))
            scratch = [pltpu.VMEM((tm_c, tn), jnp.float32)]
            dims = ("parallel", "parallel", "arbitrary")

        out_p = pl.pallas_call(
            kernel,
            out_shape=jax.ShapeDtypeStruct((Bp, Np), out_dtype),
            grid_spec=pltpu.PrefetchScalarGridSpec(
                num_scalar_prefetch=0,
                grid=grid,
                in_specs=in_specs,
                out_specs=out_specs,
                scratch_shapes=scratch,
            ),
            compiler_params=pltpu.CompilerParams(
                dimension_semantics=dims,
                vmem_limit_bytes=vmem_limit,
            ),
        )(x_p, w_p, b_p)

        if (Bp, Np) != (B, N):
            out_p = out_p[:B, :N]
        return out_p

    return apply


def linear_block(x, w, b, use_activation=True, **kwargs):
    """One-shot convenience wrapper (pads parameters on this call)."""
    return make_linear_block(w, b, use_activation=use_activation, **kwargs)(x)


def reference(x, w, b, use_activation=True):
    y = x @ w + b
    if use_activation:
        y = 0.5 * y * (1.0 + jnp.tanh(_GELU_C * (y + 0.044715 * y ** 3)))
    return y


if __name__ == "__main__":
    key = jax.random.PRNGKey(0)
    kx, kw, kb = jax.random.split(key, 3)

    batch, in_dim, out_dim = 8, 32, 32

    # Deterministic init mimicking nn.Linear: U(-1/sqrt(in_dim), 1/sqrt(in_dim))
    bound = 1.0 / math.sqrt(in_dim)
    x = jax.random.normal(kx, (batch, in_dim), dtype=jnp.float32)
    w = jax.random.uniform(kw, (in_dim, out_dim), jnp.float32, -bound, bound)
    b = jax.random.uniform(kb, (out_dim,), jnp.float32, -bound, bound)

    # Build forwards once: parameter padding/casting hoisted off the hot path.
    fwd_gelu = make_linear_block(w, b, use_activation=True)
    fwd_lin = make_linear_block(w, b, use_activation=False)
    fwd_bf16 = make_linear_block(w, b, use_activation=True,
                                 compute_dtype=jnp.bfloat16)

    # Linear + GELU (f32 compute, HIGHEST matmul precision)
    out = jax.block_until_ready(fwd_gelu(x))
    ref = reference(x, w, b, use_activation=True)
    assert out.shape == (batch, out_dim)
    assert jnp.allclose(out, ref, atol=1e-5, rtol=1e-5), "GELU path mismatch"

    # Linear only (use_activation=False path of LinearBlock)
    out_lin = jax.block_until_ready(fwd_lin(x))
    ref_lin = reference(x, w, b, use_activation=False)
    assert jnp.allclose(out_lin, ref_lin, atol=1e-5, rtol=1e-5), "linear mismatch"

    # bf16-operand MXU path (f32 accumulate): bf16-class accuracy expected.
    out_bf = jax.block_until_ready(fwd_bf16(x))
    assert out_bf.shape == (batch, out_dim)
    assert jnp.allclose(out_bf.astype(jnp.float32), ref, atol=3e-2, rtol=3e-2), \
        "bf16 path mismatch"

    print("KERNEL_OK")
</pallas_src>

<mosaic_0001>
module attributes {stable_mosaic.version = 11 : i64} {
  func.func @_linear_kernel_single_k(%arg0: i32, %arg1: i32, %arg2: memref<8x128xf32, #tpu.memory_space<vmem>>, %arg3: memref<128x128xf32, #tpu.memory_space<vmem>>, %arg4: memref<1x128xf32, #tpu.memory_space<vmem>>, %arg5: memref<8x128xf32, #tpu.memory_space<vmem>>) attributes {dimension_semantics = [#tpu.dimension_semantics<parallel>, #tpu.dimension_semantics<parallel>], iteration_bounds = array<i64: 1, 1>, scalar_prefetch = 0 : i64, scratch_operands = 0 : i64, tpu.core_type = #tpu.core_type<tc>, window_params = [{transform_indices = @transform_0, window_bounds = array<i64: 8, 128>}, {transform_indices = @transform_1, window_bounds = array<i64: 128, 128>}, {transform_indices = @transform_2, window_bounds = array<i64: 1, 128>}, {transform_indices = @transform_3, window_bounds = array<i64: 8, 128>}]} {
    %c0 = arith.constant 0 : index
    %c0_0 = arith.constant 0 : index
    %0 = vector.load %arg2[%c0, %c0_0] : memref<8x128xf32, #tpu.memory_space<vmem>>, vector<8x128xf32>
    %c0_1 = arith.constant 0 : index
    %c0_2 = arith.constant 0 : index
    %1 = vector.load %arg3[%c0_1, %c0_2] : memref<128x128xf32, #tpu.memory_space<vmem>>, vector<128x128xf32>
    %cst = arith.constant dense<0.000000e+00> : vector<8x128xf32>
    %2 = tpu.matmul %0, %1, %cst {dimension_numbers = #tpu.dot_dimension_numbers<[1], [0], [0], [1], [0, 0, 1, 1], [], []>, precision = #tpu.contract_precision<fp32>} : vector<8x128xf32>, vector<128x128xf32>, vector<8x128xf32> -> vector<8x128xf32>
    %c0_3 = arith.constant 0 : index
    %c0_4 = arith.constant 0 : index
    %3 = vector.load %arg4[%c0_3, %c0_4] : memref<1x128xf32, #tpu.memory_space<vmem>>, vector<1x128xf32>
    %4 = vector.broadcast %3 : vector<1x128xf32> to vector<8x128xf32>
    %5 = arith.addf %2, %4 : vector<8x128xf32>
    %cst_5 = arith.constant 5.000000e-01 : f32
    %6 = vector.broadcast %cst_5 : f32 to vector<8x128xf32>
    %7 = arith.mulf %6, %5 : vector<8x128xf32>
    %8 = arith.mulf %5, %5 : vector<8x128xf32>
    %9 = arith.mulf %8, %5 : vector<8x128xf32>
    %cst_6 = arith.constant 4.471500e-02 : f32
    %10 = vector.broadcast %cst_6 : f32 to vector<8x128xf32>
    %11 = arith.mulf %10, %9 : vector<8x128xf32>
    %12 = arith.addf %5, %11 : vector<8x128xf32>
    %cst_7 = arith.constant 0.797884583 : f32
    %13 = vector.broadcast %cst_7 : f32 to vector<8x128xf32>
    %14 = arith.mulf %13, %12 : vector<8x128xf32>
    %15 = math.tanh %14 : vector<8x128xf32>
    %cst_8 = arith.constant 1.000000e+00 : f32
    %16 = vector.broadcast %cst_8 : f32 to vector<8x128xf32>
    %17 = arith.addf %16, %15 : vector<8x128xf32>
    %18 = arith.mulf %7, %17 : vector<8x128xf32>
    %c0_9 = arith.constant 0 : index
    %c0_10 = arith.constant 0 : index
    %19 = vector.load %arg5[%c0_9, %c0_10] : memref<8x128xf32, #tpu.memory_space<vmem>>, vector<8x128xf32>
    tpu.vector_store %arg5[%c0_9, %c0_10], %18 {strides = array<i32>} : memref<8x128xf32, #tpu.memory_space<vmem>>, vector<8x128xf32>,
    return
  }
  func.func @transform_0(%arg0: i32, %arg1: i32) -> (i32, i32) {
    %c0_i32 = arith.constant 0 : i32
    %c0_i32_0 = arith.constant 0 : i32
    return %arg0, %c0_i32 : i32, i32
  }
  func.func @transform_1(%arg0: i32, %arg1: i32) -> (i32, i32) {
    %c0_i32 = arith.constant 0 : i32
    %c0_i32_0 = arith.constant 0 : i32
    return %c0_i32, %arg1 : i32, i32
  }
  func.func @transform_2(%arg0: i32, %arg1: i32) -> (i32, i32) {
    %c0_i32 = arith.constant 0 : i32
    %c0_i32_0 = arith.constant 0 : i32
    return %c0_i32, %arg1 : i32, i32
  }
  func.func @transform_3(%arg0: i32, %arg1: i32) -> (i32, i32) {
    %c0_i32 = arith.constant 0 : i32
    return %arg0, %arg1 : i32, i32
  }
}

</mosaic_0001>

<llo_original>
// kernel: tpu_custom_call.1
$region0: #{tpu_custom_call.1}
  #allocation0 [shape = 'u32[]', space=smem, size = 0x4, offset = 0x4, fixed_abs, tag = 'smem constant byte address 0x4 - core index']
  #allocation1 [shape = 'u32[144,128]{1,0:T(1,128)}', space=vmem, size = 0x12000, scoped, tag = 'internal scratch']
  %s0 = inlined_call_operand.hbm [shape: f32[8,128], index: 0, kind: input, shape index: {}]
  %s1 = inlined_call_operand.hbm [shape: f32[128,128], index: 1, kind: input, shape index: {}]
  %s2 = inlined_call_operand.vmem [shape: f32[1,128], index: 2, kind: input, shape index: {}]
  %s3 = inlined_call_operand.hbm [shape: f32[8,128], index: 3, kind: output, shape index: {}]
  %s4 = sld [smem:[#allocation0]]
  $region30: #{tpu_custom_call.1} parent=0
    _
  %s6 = ssub.s32 1, %s4
  %s7 = scalar_select 0, %s6, %s4
  $region1: #{tpu_custom_call.1} parent=0
    #allocation2 [shape = 'u8[4096]{0}', space=vmem, size = 0x1000, scoped, tag = 'input window, operand 0, single buffered']
    #allocation3 [shape = 's32[1]{0}', space=sflag, size = 0x4, scoped, tag = 'scoped memory for tpu_custom_call.1']
    #allocation4 [shape = 's32[1]{0}', space=sflag, size = 0x4, scoped, tag = 'scoped memory for tpu_custom_call.1']
    #allocation5 [shape = 'u8[65536]{0}', space=vmem, size = 0x10000, scoped, tag = 'input window, operand 1, single buffered']
    #allocation6 [shape = 's32[1]{0}', space=sflag, size = 0x4, scoped, tag = 'scoped memory for tpu_custom_call.1']
    #allocation7 [shape = 'u8[4096]{0}', space=vmem, size = 0x1000, scoped, tag = 'output window, operand 0, single buffered']
    %8 = vsyncpa [#allocation3], 0
    %9 = vsyncpa [#allocation6], 0
    %10 = vsyncpa [#allocation4], 0
    // Predicated region
    $region2: #{tpu_custom_call.1} parent=1 // pred_check
      _
    $region3: #{tpu_custom_call.1} parent=1 // pred_check_branch
      %12 = sbr.rel (0) target = $region5
    $region4: #{tpu_custom_call.1} parent=1 // pred_region
      %s14 = ssub.s32 128, 128
      %15 = vsyncadd [#allocation3], %s14
      %s17 = sshll.u32 [#allocation2], 4
      %s18 = int_to_ptr.vmem [resolvable:$true] %s17
      %20 = dma.hbm_to_vmem [thread:$0]  %s0, 128, %s18, [#allocation3]
    $region5: #{tpu_custom_call.1} parent=1 // pred_fallthru
      _
    // Predicated region
    $region6: #{tpu_custom_call.1} parent=1 // pred_check
      _
    $region7: #{tpu_custom_call.1} parent=1 // pred_check_branch
      %22 = sbr.rel (0) target = $region9
    $region8: #{tpu_custom_call.1} parent=1 // pred_region
      %s24 = ssub.s32 2048, 2048
      %25 = vsyncadd [#allocation6], %s24
      %s26 = sshll.u32 [#allocation5], 4
      %s27 = int_to_ptr.vmem [resolvable:$true] %s26
      %32 = dma.hbm_to_vmem [thread:$0]  %s1, 2048, %s27, [#allocation6], 128, 128, 8
    $region9: #{tpu_custom_call.1} parent=1 // pred_fallthru
      _
    // Predicated region
    $region10: #{tpu_custom_call.1} parent=1 // pred_check
      _
    $region11: #{tpu_custom_call.1} parent=1 // pred_check_branch
      %34 = sbr.rel (0) target = $region13
    $region12: #{tpu_custom_call.1} parent=1 // pred_region
      _
    $region13: #{tpu_custom_call.1} parent=1 // pred_fallthru
      _
    // Predicated region
    $region14: #{tpu_custom_call.1} parent=1 // pred_check
      _
    $region15: #{tpu_custom_call.1} parent=1 // pred_check_branch
      %36 = sbr.rel (0) target = $region17
    $region16: #{tpu_custom_call.1} parent=1 // pred_region
      %37 = dma.done [#allocation3], 128
    $region17: #{tpu_custom_call.1} parent=1 // pred_fallthru
      _
    // Predicated region
    $region18: #{tpu_custom_call.1} parent=1 // pred_check
      _
    $region19: #{tpu_custom_call.1} parent=1 // pred_check_branch
      %39 = sbr.rel (0) target = $region21
    $region20: #{tpu_custom_call.1} parent=1 // pred_region
      %40 = dma.done [#allocation6], 2048
    $region21: #{tpu_custom_call.1} parent=1 // pred_fallthru
      _
    %v41 = vld [vmem:[#allocation2] sm:$0xff]
    %v42 = vld [vmem:[#allocation5] sm:$0xff]
    %v43 = vld [vmem:[#allocation5 + $0x8] sm:$0xff]
    %v44 = vld [vmem:[#allocation5 + $0x10] sm:$0xff]
    %v45 = vld [vmem:[#allocation5 + $0x18] sm:$0xff]
    %v46 = vld [vmem:[#allocation5 + $0x20] sm:$0xff]
    %v47 = vld [vmem:[#allocation5 + $0x28] sm:$0xff]
    %v48 = vld [vmem:[#allocation5 + $0x30] sm:$0xff]
    %v49 = vld [vmem:[#allocation5 + $0x38] sm:$0xff]
    %v50 = vld [vmem:[#allocation5 + $0x40] sm:$0xff]
    %v51 = vld [vmem:[#allocation5 + $0x48] sm:$0xff]
    %v52 = vld [vmem:[#allocation5 + $0x50] sm:$0xff]
    %v53 = vld [vmem:[#allocation5 + $0x58] sm:$0xff]
    %v54 = vld [vmem:[#allocation5 + $0x60] sm:$0xff]
    %v55 = vld [vmem:[#allocation5 + $0x68] sm:$0xff]
    %v56 = vld [vmem:[#allocation5 + $0x70] sm:$0xff]
    %v57 = vld [vmem:[#allocation5 + $0x78] sm:$0xff]
    %v58 = vld [vmem:[%s2] sm:$0x1]
    %v60 = vlaneseq
    %v61 = vshrl.u32 %v60, 7
    %v62 = vsub.s32 0, %v61
    %v63 = vrot.slane %v58, %v62
    %65 = vmatprep.subr.mxu0 0.0
    %v66 = vand.u32 %v42, 4294901760
    %67 = vmatpush1.msra.mxu0 %v66
    %68 = vmatprep.subr.mxu0 0.0
    %v69 = vand.u32 %v43, 4294901760
    %70 = vmatpush1.msra.mxu0 %v69
    %71 = vmatprep.subr.mxu0 0.0
    %v72 = vand.u32 %v44, 4294901760
    %73 = vmatpush1.msra.mxu0 %v72
    %74 = vmatprep.subr.mxu0 0.0
    %v75 = vand.u32 %v45, 4294901760
    %76 = vmatpush1.msra.mxu0 %v75
    %77 = vmatprep.subr.mxu0 0.0
    %v78 = vand.u32 %v46, 4294901760
    %79 = vmatpush1.msra.mxu0 %v78
    %80 = vmatprep.subr.mxu0 0.0
    %v81 = vand.u32 %v47, 4294901760
    %82 = vmatpush1.msra.mxu0 %v81
    %83 = vmatprep.subr.mxu0 0.0
    %v84 = vand.u32 %v48, 4294901760
    %85 = vmatpush1.msra.mxu0 %v84
    %86 = vmatprep.subr.mxu0 0.0
    %v87 = vand.u32 %v49, 4294901760
    %88 = vmatpush1.msra.mxu0 %v87
    %89 = vmatprep.subr.mxu0 0.0
    %v90 = vand.u32 %v50, 4294901760
    %91 = vmatpush1.msra.mxu0 %v90
    %92 = vmatprep.subr.mxu0 0.0
    %v93 = vand.u32 %v51, 4294901760
    %94 = vmatpush1.msra.mxu0 %v93
    %95 = vmatprep.subr.mxu0 0.0
    %v96 = vand.u32 %v52, 4294901760
    %97 = vmatpush1.msra.mxu0 %v96
    %98 = vmatprep.subr.mxu0 0.0
    %v99 = vand.u32 %v53, 4294901760
    %100 = vmatpush1.msra.mxu0 %v99
    %101 = vmatprep.subr.mxu0 0.0
    %v102 = vand.u32 %v54, 4294901760
    %103 = vmatpush1.msra.mxu0 %v102
    %104 = vmatprep.subr.mxu0 0.0
    %v105 = vand.u32 %v55, 4294901760
    %106 = vmatpush1.msra.mxu0 %v105
    %107 = vmatprep.subr.mxu0 0.0
    %v108 = vand.u32 %v56, 4294901760
    %109 = vmatpush1.msra.mxu0 %v108
    %110 = vmatprep.subr.mxu0 0.0
    %v111 = vand.u32 %v57, 4294901760
    %112 = vmatpush1.msra.mxu0 %v111
    %113 = vmatprep.subr.mxu0 0.0
    %114 = vmatpush1.msra.mxu0 0.0
    %115 = vmatprep.subr.mxu0 0.0
    %116 = vmatpush1.msra.mxu0 0.0
    %117 = vmatprep.subr.mxu0 0.0
    %118 = vmatpush1.msra.mxu0 0.0
    %119 = vmatprep.subr.mxu0 0.0
    %120 = vmatpush1.msra.mxu0 0.0
    %121 = vmatprep.subr.mxu0 0.0
    %122 = vmatpush1.msra.mxu0 0.0
    %123 = vmatprep.subr.mxu0 0.0
    %124 = vmatpush1.msra.mxu0 0.0
    %125 = vmatprep.subr.mxu0 0.0
    %126 = vmatpush1.msra.mxu0 0.0
    %127 = vmatprep.subr.mxu0 0.0
    %128 = vmatpush1.msra.mxu0 0.0
    %129 = vmatprep.subr.mxu0 0.0
    %130 = vmatpush1.msra.mxu0 0.0
    %131 = vmatprep.subr.mxu0 0.0
    %132 = vmatpush1.msra.mxu0 0.0
    %133 = vmatprep.subr.mxu0 0.0
    %134 = vmatpush1.msra.mxu0 0.0
    %135 = vmatprep.subr.mxu0 0.0
    %136 = vmatpush1.msra.mxu0 0.0
    %137 = vmatprep.subr.mxu0 0.0
    %138 = vmatpush1.msra.mxu0 0.0
    %139 = vmatprep.subr.mxu0 0.0
    %140 = vmatpush1.msra.mxu0 0.0
    %141 = vmatprep.subr.mxu0 0.0
    %142 = vmatpush1.msra.mxu0 0.0
    %143 = vmatprep.subr.mxu0 0.0
    %144 = vmatpush1.msra.mxu0 0.0
    %145 = vmatprep.mubr.f32.mxu0 0.0
    %v146 = vand.u32 %v41, 4294901760
    %v147 = vsub.f32 %v41, %v146
    %v148 = vand.u32 %v147, 4294901760
    %v149 = vsub.f32 %v147, %v148
    %v150 = vand.u32 %v149, 4294901760
    %151 = vmatmul.mubr.f32.gmra.mrb[0].mxu0 %v150
    %v152 = vpop.f32.mrb[0].mxu0
    %v153 = vadd.f32 %v63, %v152
    %v154 = vpop.f32.mrb[0].mxu0
    %155 = vdwg.mxu0
    %156 = vmatprep.subr.mxu0 0.0
    %v157 = vand.u32 %v42, 4294901760
    %v158 = vsub.f32 %v42, %v157
    %v159 = vand.u32 %v158, 4294901760
    %v160 = vsub.f32 %v158, %v159
    %v161 = vand.u32 %v160, 4294901760
    %162 = vmatpush1.msra.mxu0 %v161
    %163 = vmatprep.subr.mxu0 0.0
    %v164 = vand.u32 %v43, 4294901760
    %v165 = vsub.f32 %v43, %v164
    %v166 = vand.u32 %v165, 4294901760
    %v167 = vsub.f32 %v165, %v166
    %v168 = vand.u32 %v167, 4294901760
    %169 = vmatpush1.msra.mxu0 %v168
    %170 = vmatprep.subr.mxu0 0.0
    %v171 = vand.u32 %v44, 4294901760
    %v172 = vsub.f32 %v44, %v171
    %v173 = vand.u32 %v172, 4294901760
    %v174 = vsub.f32 %v172, %v173
    %v175 = vand.u32 %v174, 4294901760
    %176 = vmatpush1.msra.mxu0 %v175
    %177 = vmatprep.subr.mxu0 0.0
    %v178 = vand.u32 %v45, 4294901760
    %v179 = vsub.f32 %v45, %v178
    %v180 = vand.u32 %v179, 4294901760
    %v181 = vsub.f32 %v179, %v180
    %v182 = vand.u32 %v181, 4294901760
    %183 = vmatpush1.msra.mxu0 %v182
    %184 = vmatprep.subr.mxu0 0.0
    %v185 = vand.u32 %v46, 4294901760
    %v186 = vsub.f32 %v46, %v185
    %v187 = vand.u32 %v186, 4294901760
    %v188 = vsub.f32 %v186, %v187
    %v189 = vand.u32 %v188, 4294901760
    %190 = vmatpush1.msra.mxu0 %v189
    %191 = vmatprep.subr.mxu0 0.0
    %v192 = vand.u32 %v47, 4294901760
    %v193 = vsub.f32 %v47, %v192
    %v194 = vand.u32 %v193, 4294901760
    %v195 = vsub.f32 %v193, %v194
    %v196 = vand.u32 %v195, 4294901760
    %197 = vmatpush1.msra.mxu0 %v196
    %198 = vmatprep.subr.mxu0 0.0
    %v199 = vand.u32 %v48, 4294901760
    %v200 = vsub.f32 %v48, %v199
    %v201 = vand.u32 %v200, 4294901760
    %v202 = vsub.f32 %v200, %v201
    %v203 = vand.u32 %v202, 4294901760
    %204 = vmatpush1.msra.mxu0 %v203
    %205 = vmatprep.subr.mxu0 0.0
    %v206 = vand.u32 %v49, 4294901760
    %v207 = vsub.f32 %v49, %v206
    %v208 = vand.u32 %v207, 4294901760
    %v209 = vsub.f32 %v207, %v208
    %v210 = vand.u32 %v209, 4294901760
    %211 = vmatpush1.msra.mxu0 %v210
    %212 = vmatprep.subr.mxu0 0.0
    %v213 = vand.u32 %v50, 4294901760
    %v214 = vsub.f32 %v50, %v213
    %v215 = vand.u32 %v214, 4294901760
    %v216 = vsub.f32 %v214, %v215
    %v217 = vand.u32 %v216, 4294901760
    %218 = vmatpush1.msra.mxu0 %v217
    %219 = vmatprep.subr.mxu0 0.0
    %v220 = vand.u32 %v51, 4294901760
    %v221 = vsub.f32 %v51, %v220
    %v222 = vand.u32 %v221, 4294901760
    %v223 = vsub.f32 %v221, %v222
    %v224 = vand.u32 %v223, 4294901760
    %225 = vmatpush1.msra.mxu0 %v224
    %226 = vmatprep.subr.mxu0 0.0
    %v227 = vand.u32 %v52, 4294901760
    %v228 = vsub.f32 %v52, %v227
    %v229 = vand.u32 %v228, 4294901760
    %v230 = vsub.f32 %v228, %v229
    %v231 = vand.u32 %v230, 4294901760
    %232 = vmatpush1.msra.mxu0 %v231
    %233 = vmatprep.subr.mxu0 0.0
    %v234 = vand.u32 %v53, 4294901760
    %v235 = vsub.f32 %v53, %v234
    %v236 = vand.u32 %v235, 4294901760
    %v237 = vsub.f32 %v235, %v236
    %v238 = vand.u32 %v237, 4294901760
    %239 = vmatpush1.msra.mxu0 %v238
    %240 = vmatprep.subr.mxu0 0.0
    %v241 = vand.u32 %v54, 4294901760
    %v242 = vsub.f32 %v54, %v241
    %v243 = vand.u32 %v242, 4294901760
    %v244 = vsub.f32 %v242, %v243
    %v245 = vand.u32 %v244, 4294901760
    %246 = vmatpush1.msra.mxu0 %v245
    %247 = vmatprep.subr.mxu0 0.0
    %v248 = vand.u32 %v55, 4294901760
    %v249 = vsub.f32 %v55, %v248
    %v250 = vand.u32 %v249, 4294901760
    %v251 = vsub.f32 %v249, %v250
    %v252 = vand.u32 %v251, 4294901760
    %253 = vmatpush1.msra.mxu0 %v252
    %254 = vmatprep.subr.mxu0 0.0
    %v255 = vand.u32 %v56, 4294901760
    %v256 = vsub.f32 %v56, %v255
    %v257 = vand.u32 %v256, 4294901760
    %v258 = vsub.f32 %v256, %v257
    %v259 = vand.u32 %v258, 4294901760
    %260 = vmatpush1.msra.mxu0 %v259
    %261 = vmatprep.subr.mxu0 0.0
    %v262 = vand.u32 %v57, 4294901760
    %v263 = vsub.f32 %v57, %v262
    %v264 = vand.u32 %v263, 4294901760
    %v265 = vsub.f32 %v263, %v264
    %v266 = vand.u32 %v265, 4294901760
    %267 = vmatpush1.msra.mxu0 %v266
    %268 = vmatprep.subr.mxu0 0.0
    %269 = vmatpush1.msra.mxu0 0.0
    %270 = vmatprep.subr.mxu0 0.0
    %271 = vmatpush1.msra.mxu0 0.0
    %272 = vmatprep.subr.mxu0 0.0
    %273 = vmatpush1.msra.mxu0 0.0
    %274 = vmatprep.subr.mxu0 0.0
    %275 = vmatpush1.msra.mxu0 0.0
    %276 = vmatprep.subr.mxu0 0.0
    %277 = vmatpush1.msra.mxu0 0.0
    %278 = vmatprep.subr.mxu0 0.0
    %279 = vmatpush1.msra.mxu0 0.0
    %280 = vmatprep.subr.mxu0 0.0
    %281 = vmatpush1.msra.mxu0 0.0
    %282 = vmatprep.subr.mxu0 0.0
    %283 = vmatpush1.msra.mxu0 0.0
    %284 = vmatprep.subr.mxu0 0.0
    %285 = vmatpush1.msra.mxu0 0.0
    %286 = vmatprep.subr.mxu0 0.0
    %287 = vmatpush1.msra.mxu0 0.0
    %288 = vmatprep.subr.mxu0 0.0
    %289 = vmatpush1.msra.mxu0 0.0
    %290 = vmatprep.subr.mxu0 0.0
    %291 = vmatpush1.msra.mxu0 0.0
    %292 = vmatprep.subr.mxu0 0.0
    %293 = vmatpush1.msra.mxu0 0.0
    %294 = vmatprep.subr.mxu0 0.0
    %295 = vmatpush1.msra.mxu0 0.0
    %296 = vmatprep.subr.mxu0 0.0
    %297 = vmatpush1.msra.mxu0 0.0
    %298 = vmatprep.subr.mxu0 0.0
    %299 = vmatpush1.msra.mxu0 0.0
    %300 = vmatprep.mubr.f32.mxu0 0.0
    %v301 = vand.u32 %v41, 4294901760
    %302 = vmatmul.mubr.f32.gmra.mrb[0].mxu0 %v301
    %v303 = vpop.f32.mrb[0].mxu0
    %v304 = vadd.f32 %v153, %v303
    %v305 = vpop.f32.mrb[0].mxu0
    %306 = vdwg.mxu0
    %307 = vmatprep.subr.mxu0 0.0
    %v308 = vand.u32 %v42, 4294901760
    %v309 = vsub.f32 %v42, %v308
    %310 = vmatpush1.msra.mxu0 %v309
    %311 = vmatprep.subr.mxu0 0.0
    %v312 = vand.u32 %v43, 4294901760
    %v313 = vsub.f32 %v43, %v312
    %314 = vmatpush1.msra.mxu0 %v313
    %315 = vmatprep.subr.mxu0 0.0
    %v316 = vand.u32 %v44, 4294901760
    %v317 = vsub.f32 %v44, %v316
    %318 = vmatpush1.msra.mxu0 %v317
    %319 = vmatprep.subr.mxu0 0.0
    %v320 = vand.u32 %v45, 4294901760
    %v321 = vsub.f32 %v45, %v320
    %322 = vmatpush1.msra.mxu0 %v321
    %323 = vmatprep.subr.mxu0 0.0
    %v324 = vand.u32 %v46, 4294901760
    %v325 = vsub.f32 %v46, %v324
    %326 = vmatpush1.msra.mxu0 %v325
    %327 = vmatprep.subr.mxu0 0.0
    %v328 = vand.u32 %v47, 4294901760
    %v329 = vsub.f32 %v47, %v328
    %330 = vmatpush1.msra.mxu0 %v329
    %331 = vmatprep.subr.mxu0 0.0
    %v332 = vand.u32 %v48, 4294901760
    %v333 = vsub.f32 %v48, %v332
    %334 = vmatpush1.msra.mxu0 %v333
    %335 = vmatprep.subr.mxu0 0.0
    %v336 = vand.u32 %v49, 4294901760
    %v337 = vsub.f32 %v49, %v336
    %338 = vmatpush1.msra.mxu0 %v337
    %339 = vmatprep.subr.mxu0 0.0
    %v340 = vand.u32 %v50, 4294901760
    %v341 = vsub.f32 %v50, %v340
    %342 = vmatpush1.msra.mxu0 %v341
    %343 = vmatprep.subr.mxu0 0.0
    %v344 = vand.u32 %v51, 4294901760
    %v345 = vsub.f32 %v51, %v344
    %346 = vmatpush1.msra.mxu0 %v345
    %347 = vmatprep.subr.mxu0 0.0
    %v348 = vand.u32 %v52, 4294901760
    %v349 = vsub.f32 %v52, %v348
    %350 = vmatpush1.msra.mxu0 %v349
    %351 = vmatprep.subr.mxu0 0.0
    %v352 = vand.u32 %v53, 4294901760
    %v353 = vsub.f32 %v53, %v352
    %354 = vmatpush1.msra.mxu0 %v353
    %355 = vmatprep.subr.mxu0 0.0
    %v356 = vand.u32 %v54, 4294901760
    %v357 = vsub.f32 %v54, %v356
    %358 = vmatpush1.msra.mxu0 %v357
    %359 = vmatprep.subr.mxu0 0.0
    %v360 = vand.u32 %v55, 4294901760
    %v361 = vsub.f32 %v55, %v360
    %362 = vmatpush1.msra.mxu0 %v361
    %363 = vmatprep.subr.mxu0 0.0
    %v364 = vand.u32 %v56, 4294901760
    %v365 = vsub.f32 %v56, %v364
    %366 = vmatpush1.msra.mxu0 %v365
    %367 = vmatprep.subr.mxu0 0.0
    %v368 = vand.u32 %v57, 4294901760
    %v369 = vsub.f32 %v57, %v368
    %370 = vmatpush1.msra.mxu0 %v369
    %371 = vmatprep.subr.mxu0 0.0
    %372 = vmatpush1.msra.mxu0 0.0
    %373 = vmatprep.subr.mxu0 0.0
    %374 = vmatpush1.msra.mxu0 0.0
    %375 = vmatprep.subr.mxu0 0.0
    %376 = vmatpush1.msra.mxu0 0.0
    %377 = vmatprep.subr.mxu0 0.0
    %378 = vmatpush1.msra.mxu0 0.0
    %379 = vmatprep.subr.mxu0 0.0
    %380 = vmatpush1.msra.mxu0 0.0
    %381 = vmatprep.subr.mxu0 0.0
    %382 = vmatpush1.msra.mxu0 0.0
    %383 = vmatprep.subr.mxu0 0.0
    %384 = vmatpush1.msra.mxu0 0.0
    %385 = vmatprep.subr.mxu0 0.0
    %386 = vmatpush1.msra.mxu0 0.0
    %387 = vmatprep.subr.mxu0 0.0
    %388 = vmatpush1.msra.mxu0 0.0
    %389 = vmatprep.subr.mxu0 0.0
    %390 = vmatpush1.msra.mxu0 0.0
    %391 = vmatprep.subr.mxu0 0.0
    %392 = vmatpush1.msra.mxu0 0.0
    %393 = vmatprep.subr.mxu0 0.0
    %394 = vmatpush1.msra.mxu0 0.0
    %395 = vmatprep.subr.mxu0 0.0
    %396 = vmatpush1.msra.mxu0 0.0
    %397 = vmatprep.subr.mxu0 0.0
    %398 = vmatpush1.msra.mxu0 0.0
    %399 = vmatprep.subr.mxu0 0.0
    %400 = vmatpush1.msra.mxu0 0.0
    %401 = vmatprep.subr.mxu0 0.0
    %402 = vmatpush1.msra.mxu0 0.0
    %403 = vmatprep.mubr.f32.mxu0 0.0
    %v404 = vand.u32 %v41, 4294901760
    %v405 = vsub.f32 %v41, %v404
    %406 = vmatmul.mubr.f32.gmra.mrb[0].mxu0 %v405
    %v407 = vpop.f32.mrb[0].mxu0
    %v408 = vadd.f32 %v304, %v407
    %v409 = vpop.f32.mrb[0].mxu0
    %410 = vdwg.mxu0
    %411 = vmatprep.subr.mxu0 0.0
    %v412 = vand.u32 %v42, 4294901760
    %413 = vmatpush1.msra.mxu0 %v412
    %414 = vmatprep.subr.mxu0 0.0
    %v415 = vand.u32 %v43, 4294901760
    %416 = vmatpush1.msra.mxu0 %v415
    %417 = vmatprep.subr.mxu0 0.0
    %v418 = vand.u32 %v44, 4294901760
    %419 = vmatpush1.msra.mxu0 %v418
    %420 = vmatprep.subr.mxu0 0.0
    %v421 = vand.u32 %v45, 4294901760
    %422 = vmatpush1.msra.mxu0 %v421
    %423 = vmatprep.subr.mxu0 0.0
    %v424 = vand.u32 %v46, 4294901760
    %425 = vmatpush1.msra.mxu0 %v424
    %426 = vmatprep.subr.mxu0 0.0
    %v427 = vand.u32 %v47, 4294901760
    %428 = vmatpush1.msra.mxu0 %v427
    %429 = vmatprep.subr.mxu0 0.0
    %v430 = vand.u32 %v48, 4294901760
    %431 = vmatpush1.msra.mxu0 %v430
    %432 = vmatprep.subr.mxu0 0.0
    %v433 = vand.u32 %v49, 4294901760
    %434 = vmatpush1.msra.mxu0 %v433
    %435 = vmatprep.subr.mxu0 0.0
    %v436 = vand.u32 %v50, 4294901760
    %437 = vmatpush1.msra.mxu0 %v436
    %438 = vmatprep.subr.mxu0 0.0
    %v439 = vand.u32 %v51, 4294901760
    %440 = vmatpush1.msra.mxu0 %v439
    %441 = vmatprep.subr.mxu0 0.0
    %v442 = vand.u32 %v52, 4294901760
    %443 = vmatpush1.msra.mxu0 %v442
    %444 = vmatprep.subr.mxu0 0.0
    %v445 = vand.u32 %v53, 4294901760
    %446 = vmatpush1.msra.mxu0 %v445
    %447 = vmatprep.subr.mxu0 0.0
    %v448 = vand.u32 %v54, 4294901760
    %449 = vmatpush1.msra.mxu0 %v448
    %450 = vmatprep.subr.mxu0 0.0
    %v451 = vand.u32 %v55, 4294901760
    %452 = vmatpush1.msra.mxu0 %v451
    %453 = vmatprep.subr.mxu0 0.0
    %v454 = vand.u32 %v56, 4294901760
    %455 = vmatpush1.msra.mxu0 %v454
    %456 = vmatprep.subr.mxu0 0.0
    %v457 = vand.u32 %v57, 4294901760
    %458 = vmatpush1.msra.mxu0 %v457
    %459 = vmatprep.subr.mxu0 0.0
    %460 = vmatpush1.msra.mxu0 0.0
    %461 = vmatprep.subr.mxu0 0.0
    %462 = vmatpush1.msra.mxu0 0.0
    %463 = vmatprep.subr.mxu0 0.0
    %464 = vmatpush1.msra.mxu0 0.0
    %465 = vmatprep.subr.mxu0 0.0
    %466 = vmatpush1.msra.mxu0 0.0
    %467 = vmatprep.subr.mxu0 0.0
    %468 = vmatpush1.msra.mxu0 0.0
    %469 = vmatprep.subr.mxu0 0.0
    %470 = vmatpush1.msra.mxu0 0.0
    %471 = vmatprep.subr.mxu0 0.0
    %472 = vmatpush1.msra.mxu0 0.0
    %473 = vmatprep.subr.mxu0 0.0
    %474 = vmatpush1.msra.mxu0 0.0
    %475 = vmatprep.subr.mxu0 0.0
    %476 = vmatpush1.msra.mxu0 0.0
    %477 = vmatprep.subr.mxu0 0.0
    %478 = vmatpush1.msra.mxu0 0.0
    %479 = vmatprep.subr.mxu0 0.0
    %480 = vmatpush1.msra.mxu0 0.0
    %481 = vmatprep.subr.mxu0 0.0
    %482 = vmatpush1.msra.mxu0 0.0
    %483 = vmatprep.subr.mxu0 0.0
    %484 = vmatpush1.msra.mxu0 0.0
    %485 = vmatprep.subr.mxu0 0.0
    %486 = vmatpush1.msra.mxu0 0.0
    %487 = vmatprep.subr.mxu0 0.0
    %488 = vmatpush1.msra.mxu0 0.0
    %489 = vmatprep.subr.mxu0 0.0
    %490 = vmatpush1.msra.mxu0 0.0
    %491 = vmatprep.mubr.f32.mxu0 0.0
    %v492 = vand.u32 %v41, 4294901760
    %v493 = vsub.f32 %v41, %v492
    %v494 = vand.u32 %v493, 4294901760
    %495 = vmatmul.mubr.f32.gmra.mrb[0].mxu0 %v494
    %v496 = vpop.f32.mrb[0].mxu0
    %v497 = vadd.f32 %v408, %v496
    %v498 = vpop.f32.mrb[0].mxu0
    %499 = vdwg.mxu0
    %500 = vmatprep.subr.mxu0 0.0
    %v501 = vand.u32 %v42, 4294901760
    %v502 = vsub.f32 %v42, %v501
    %v503 = vand.u32 %v502, 4294901760
    %504 = vmatpush1.msra.mxu0 %v503
    %505 = vmatprep.subr.mxu0 0.0
    %v506 = vand.u32 %v43, 4294901760
    %v507 = vsub.f32 %v43, %v506
    %v508 = vand.u32 %v507, 4294901760
    %509 = vmatpush1.msra.mxu0 %v508
    %510 = vmatprep.subr.mxu0 0.0
    %v511 = vand.u32 %v44, 4294901760
    %v512 = vsub.f32 %v44, %v511
    %v513 = vand.u32 %v512, 4294901760
    %514 = vmatpush1.msra.mxu0 %v513
    %515 = vmatprep.subr.mxu0 0.0
    %v516 = vand.u32 %v45, 4294901760
    %v517 = vsub.f32 %v45, %v516
    %v518 = vand.u32 %v517, 4294901760
    %519 = vmatpush1.msra.mxu0 %v518
    %520 = vmatprep.subr.mxu0 0.0
    %v521 = vand.u32 %v46, 4294901760
    %v522 = vsub.f32 %v46, %v521
    %v523 = vand.u32 %v522, 4294901760
    %524 = vmatpush1.msra.mxu0 %v523
    %525 = vmatprep.subr.mxu0 0.0
    %v526 = vand.u32 %v47, 4294901760
    %v527 = vsub.f32 %v47, %v526
    %v528 = vand.u32 %v527, 4294901760
    %529 = vmatpush1.msra.mxu0 %v528
    %530 = vmatprep.subr.mxu0 0.0
    %v531 = vand.u32 %v48, 4294901760
    %v532 = vsub.f32 %v48, %v531
    %v533 = vand.u32 %v532, 4294901760
    %534 = vmatpush1.msra.mxu0 %v533
    %535 = vmatprep.subr.mxu0 0.0
    %v536 = vand.u32 %v49, 4294901760
    %v537 = vsub.f32 %v49, %v536
    %v538 = vand.u32 %v537, 4294901760
    %539 = vmatpush1.msra.mxu0 %v538
    %540 = vmatprep.subr.mxu0 0.0
    %v541 = vand.u32 %v50, 4294901760
    %v542 = vsub.f32 %v50, %v541
    %v543 = vand.u32 %v542, 4294901760
    %544 = vmatpush1.msra.mxu0 %v543
    %545 = vmatprep.subr.mxu0 0.0
    %v546 = vand.u32 %v51, 4294901760
    %v547 = vsub.f32 %v51, %v546
    %v548 = vand.u32 %v547, 4294901760
    %549 = vmatpush1.msra.mxu0 %v548
    %550 = vmatprep.subr.mxu0 0.0
    %v551 = vand.u32 %v52, 4294901760
    %v552 = vsub.f32 %v52, %v551
    %v553 = vand.u32 %v552, 4294901760
    %554 = vmatpush1.msra.mxu0 %v553
    %555 = vmatprep.subr.mxu0 0.0
    %v556 = vand.u32 %v53, 4294901760
    %v557 = vsub.f32 %v53, %v556
    %v558 = vand.u32 %v557, 4294901760
    %559 = vmatpush1.msra.mxu0 %v558
    %560 = vmatprep.subr.mxu0 0.0
    %v561 = vand.u32 %v54, 4294901760
    %v562 = vsub.f32 %v54, %v561
    %v563 = vand.u32 %v562, 4294901760
    %564 = vmatpush1.msra.mxu0 %v563
    %565 = vmatprep.subr.mxu0 0.0
    %v566 = vand.u32 %v55, 4294901760
    %v567 = vsub.f32 %v55, %v566
    %v568 = vand.u32 %v567, 4294901760
    %569 = vmatpush1.msra.mxu0 %v568
    %570 = vmatprep.subr.mxu0 0.0
    %v571 = vand.u32 %v56, 4294901760
    %v572 = vsub.f32 %v56, %v571
    %v573 = vand.u32 %v572, 4294901760
    %574 = vmatpush1.msra.mxu0 %v573
    %575 = vmatprep.subr.mxu0 0.0
    %v576 = vand.u32 %v57, 4294901760
    %v577 = vsub.f32 %v57, %v576
    %v578 = vand.u32 %v577, 4294901760
    %579 = vmatpush1.msra.mxu0 %v578
    %580 = vmatprep.subr.mxu0 0.0
    %581 = vmatpush1.msra.mxu0 0.0
    %582 = vmatprep.subr.mxu0 0.0
    %583 = vmatpush1.msra.mxu0 0.0
    %584 = vmatprep.subr.mxu0 0.0
    %585 = vmatpush1.msra.mxu0 0.0
    %586 = vmatprep.subr.mxu0 0.0
    %587 = vmatpush1.msra.mxu0 0.0
    %588 = vmatprep.subr.mxu0 0.0
    %589 = vmatpush1.msra.mxu0 0.0
    %590 = vmatprep.subr.mxu0 0.0
    %591 = vmatpush1.msra.mxu0 0.0
    %592 = vmatprep.subr.mxu0 0.0
    %593 = vmatpush1.msra.mxu0 0.0
    %594 = vmatprep.subr.mxu0 0.0
    %595 = vmatpush1.msra.mxu0 0.0
    %596 = vmatprep.subr.mxu0 0.0
    %597 = vmatpush1.msra.mxu0 0.0
    %598 = vmatprep.subr.mxu0 0.0
    %599 = vmatpush1.msra.mxu0 0.0
    %600 = vmatprep.subr.mxu0 0.0
    %601 = vmatpush1.msra.mxu0 0.0
    %602 = vmatprep.subr.mxu0 0.0
    %603 = vmatpush1.msra.mxu0 0.0
    %604 = vmatprep.subr.mxu0 0.0
    %605 = vmatpush1.msra.mxu0 0.0
    %606 = vmatprep.subr.mxu0 0.0
    %607 = vmatpush1.msra.mxu0 0.0
    %608 = vmatprep.subr.mxu0 0.0
    %609 = vmatpush1.msra.mxu0 0.0
    %610 = vmatprep.subr.mxu0 0.0
    %611 = vmatpush1.msra.mxu0 0.0
    %612 = vmatprep.mubr.f32.mxu0 0.0
    %v613 = vand.u32 %v41, 4294901760
    %614 = vmatmul.mubr.f32.gmra.mrb[0].mxu0 %v613
    %v615 = vpop.f32.mrb[0].mxu0
    %v616 = vadd.f32 %v497, %v615
    %v617 = vpop.f32.mrb[0].mxu0
    %618 = vdwg.mxu0
    %619 = vmatprep.subr.mxu0 0.0
    %v620 = vand.u32 %v42, 4294901760
    %621 = vmatpush1.msra.mxu0 %v620
    %622 = vmatprep.subr.mxu0 0.0
    %v623 = vand.u32 %v43, 4294901760
    %624 = vmatpush1.msra.mxu0 %v623
    %625 = vmatprep.subr.mxu0 0.0
    %v626 = vand.u32 %v44, 4294901760
    %627 = vmatpush1.msra.mxu0 %v626
    %628 = vmatprep.subr.mxu0 0.0
    %v629 = vand.u32 %v45, 4294901760
    %630 = vmatpush1.msra.mxu0 %v629
    %631 = vmatprep.subr.mxu0 0.0
    %v632 = vand.u32 %v46, 4294901760
    %633 = vmatpush1.msra.mxu0 %v632
    %634 = vmatprep.subr.mxu0 0.0
    %v635 = vand.u32 %v47, 4294901760
    %636 = vmatpush1.msra.mxu0 %v635
    %637 = vmatprep.subr.mxu0 0.0
    %v638 = vand.u32 %v48, 4294901760
    %639 = vmatpush1.msra.mxu0 %v638
    %640 = vmatprep.subr.mxu0 0.0
    %v641 = vand.u32 %v49, 4294901760
    %642 = vmatpush1.msra.mxu0 %v641
    %643 = vmatprep.subr.mxu0 0.0
    %v644 = vand.u32 %v50, 4294901760
    %645 = vmatpush1.msra.mxu0 %v644
    %646 = vmatprep.subr.mxu0 0.0
    %v647 = vand.u32 %v51, 4294901760
    %648 = vmatpush1.msra.mxu0 %v647
    %649 = vmatprep.subr.mxu0 0.0
    %v650 = vand.u32 %v52, 4294901760
    %651 = vmatpush1.msra.mxu0 %v650
    %652 = vmatprep.subr.mxu0 0.0
    %v653 = vand.u32 %v53, 4294901760
    %654 = vmatpush1.msra.mxu0 %v653
    %655 = vmatprep.subr.mxu0 0.0
    %v656 = vand.u32 %v54, 4294901760
    %657 = vmatpush1.msra.mxu0 %v656
    %658 = vmatprep.subr.mxu0 0.0
    %v659 = vand.u32 %v55, 4294901760
    %660 = vmatpush1.msra.mxu0 %v659
    %661 = vmatprep.subr.mxu0 0.0
    %v662 = vand.u32 %v56, 4294901760
    %663 = vmatpush1.msra.mxu0 %v662
    %664 = vmatprep.subr.mxu0 0.0
    %v665 = vand.u32 %v57, 4294901760
    %666 = vmatpush1.msra.mxu0 %v665
    %667 = vmatprep.subr.mxu0 0.0
    %668 = vmatpush1.msra.mxu0 0.0
    %669 = vmatprep.subr.mxu0 0.0
    %670 = vmatpush1.msra.mxu0 0.0
    %671 = vmatprep.subr.mxu0 0.0
    %672 = vmatpush1.msra.mxu0 0.0
    %673 = vmatprep.subr.mxu0 0.0
    %674 = vmatpush1.msra.mxu0 0.0
    %675 = vmatprep.subr.mxu0 0.0
    %676 = vmatpush1.msra.mxu0 0.0
    %677 = vmatprep.subr.mxu0 0.0
    %678 = vmatpush1.msra.mxu0 0.0
    %679 = vmatprep.subr.mxu0 0.0
    %680 = vmatpush1.msra.mxu0 0.0
    %681 = vmatprep.subr.mxu0 0.0
    %682 = vmatpush1.msra.mxu0 0.0
    %683 = vmatprep.subr.mxu0 0.0
    %684 = vmatpush1.msra.mxu0 0.0
    %685 = vmatprep.subr.mxu0 0.0
    %686 = vmatpush1.msra.mxu0 0.0
    %687 = vmatprep.subr.mxu0 0.0
    %688 = vmatpush1.msra.mxu0 0.0
    %689 = vmatprep.subr.mxu0 0.0
    %690 = vmatpush1.msra.mxu0 0.0
    %691 = vmatprep.subr.mxu0 0.0
    %692 = vmatpush1.msra.mxu0 0.0
    %693 = vmatprep.subr.mxu0 0.0
    %694 = vmatpush1.msra.mxu0 0.0
    %695 = vmatprep.subr.mxu0 0.0
    %696 = vmatpush1.msra.mxu0 0.0
    %697 = vmatprep.subr.mxu0 0.0
    %698 = vmatpush1.msra.mxu0 0.0
    %699 = vmatprep.mubr.f32.mxu0 0.0
    %v700 = vand.u32 %v41, 4294901760
    %701 = vmatmul.mubr.f32.gmra.mrb[0].mxu0 %v700
    %v702 = vpop.f32.mrb[0].mxu0
    %v703 = vadd.f32 %v616, %v702
    %v704 = vpop.f32.mrb[0].mxu0
    %705 = vdwg.mxu0
    %v706 = vmul.f32 %v703, 0.5
    %v707 = vmul.f32 %v703, %v703
    %v708 = vmul.f32 %v707, %v703
    %v709 = vmul.f32 %v708, 0.044715
    %v710 = vadd.f32 %v703, %v709
    %v711 = vmul.f32 %v710, 0.7978846
    %v712 = vtanh.pop %v711
    %v713 = vadd.f32 %v712, 1.0
    %v714 = vmul.f32 %v706, %v713
    %715 = vst [vmem:[#allocation7] sm:$0xff] %v714
    // Predicated region
    $region22: #{tpu_custom_call.1} parent=1 // pred_check
      _
    $region23: #{tpu_custom_call.1} parent=1 // pred_check_branch
      %717 = sbr.rel (0) target = $region25
    $region24: #{tpu_custom_call.1} parent=1 // pred_region
      %s719 = ssub.s32 128, 128
      %720 = vsyncadd [#allocation4], %s719
      %s722 = sshll.u32 [#allocation7], 4
      %s723 = int_to_ptr.vmem [resolvable:$true] %s722
      %725 = dma.vmem_to_hbm [thread:$0]  %s723, 128, %s3, [#allocation4]
    $region25: #{tpu_custom_call.1} parent=1 // pred_fallthru
      _
    // Predicated region
    $region26: #{tpu_custom_call.1} parent=1 // pred_check
      _
    $region27: #{tpu_custom_call.1} parent=1 // pred_check_branch
      %727 = sbr.rel (0) target = $region29
    $region28: #{tpu_custom_call.1} parent=1 // pred_region
      %728 = dma.done [#allocation4], 128
    $region29: #{tpu_custom_call.1} parent=1 // pred_fallthru
      _
    %729 = vsyncpa [#allocation3], 1
    %730 = vsyncpa [#allocation6], 1
    %731 = vsyncpa [#allocation4], 1

</llo_original>
